<compile_context>
chip_gen: v6e
topology: v6e:2x2x1
jax: 0.10.0
libtpu: 0.0.40
codegen_flags: <defaults>
</compile_context>

<pallas_src>
import functools

import jax
import jax.numpy as jnp
from jax.experimental import pallas as pl
from jax.experimental.pallas import tpu as pltpu


# ----------------------------------------------------------------------------
# Pass 1: global average pool (tiled over HW) + squeeze/excite FCs + sigmoid.
# ----------------------------------------------------------------------------
def _pool_fc_kernel(x_ref, w1_ref, b1_ref, w2_ref, b2_ref, s_ref, acc_ref,
                    *, inv_hw):
    hw_idx = pl.program_id(1)

    @pl.when(hw_idx == 0)
    def _init():
        acc_ref[...] = jnp.zeros_like(acc_ref)

    # Per-channel partial sum over this HW tile, accumulated in f32.
    acc_ref[...] += jnp.sum(x_ref[...].astype(jnp.float32), axis=-1)  # (Bt, C)

    @pl.when(hw_idx == pl.num_programs(1) - 1)
    def _finalize():
        pooled = acc_ref[...] * inv_hw                      # (Bt, C) lane-major rows

        # Squeeze FC (C -> Cr): VPU broadcast-multiply + cross-lane sum (no MXU).
        h = jnp.sum(pooled[:, None, :] * w1_ref[...][None, :, :], axis=-1)  # (Bt, Cr)
        h = jnp.maximum(h + b1_ref[...], 0.0)

        # Excite FC (Cr -> C) + sigmoid.
        s = jnp.sum(h[:, None, :] * w2_ref[...][None, :, :], axis=-1)       # (Bt, C)
        s = jax.nn.sigmoid(s + b2_ref[...])

        s_ref[...] = s[:, None, :].astype(s_ref.dtype)      # lane-dense (Bt, 1, C)


# ----------------------------------------------------------------------------
# Pass 2: per-channel scale, streamed over lane-dense (Bt, C, HWt) tiles.
# ----------------------------------------------------------------------------
def _scale_kernel(x_ref, s_ref, o_ref):
    # (Bt, C, HWt) * (Bt, C, 1) -> broadcast over the lane (HW) axis.
    o_ref[...] = (x_ref[...] * s_ref[...]).astype(o_ref.dtype)


# ----------------------------------------------------------------------------
# Tile selection: lane dim multiple of 128 (or full HW), ~target bytes / step.
# ----------------------------------------------------------------------------
def _pick_tiles(B, C, HW, itemsize, target_block_bytes=4 << 20):
    if HW % 128 == 0:
        max_lanes = max(128, (target_block_bytes // max(C * itemsize, 1)) // 128 * 128)
        hwt = 128
        k = 1
        while k * 128 <= min(HW, max_lanes):
            if HW % (k * 128) == 0:
                hwt = k * 128
            k += 1
    else:
        # Non-128-divisible spatial extent: keep the full (correct) block.
        hwt = HW

    slab = C * hwt * itemsize
    bt = max(1, min(B, target_block_bytes // max(slab, 1)))
    while B % bt:
        bt -= 1
    return int(bt), int(hwt)


# ----------------------------------------------------------------------------
# Wrapper
# ----------------------------------------------------------------------------
def ca_layer(x, w1, b1, w2, b2):
    """x: (B, C, H, W).  w1: (C/r, C), b1: (C/r,), w2: (C, C/r), b2: (C,)."""
    B, C, H, W = x.shape
    HW = H * W
    Cr = w1.shape[0]

    x_flat = x.reshape(B, C, HW)
    w1f = w1.astype(jnp.float32)
    w2f = w2.astype(jnp.float32)
    b1r = b1.astype(jnp.float32).reshape(1, Cr)
    b2r = b2.astype(jnp.float32).reshape(1, C)

    itemsize = jnp.dtype(x.dtype).itemsize
    bt, hwt = _pick_tiles(B, C, HW, itemsize)
    block_bytes = bt * C * hwt * itemsize
    # in + out double-buffered plus headroom; keep well under v7x's 64 MiB.
    vmem_limit = int(min(48 << 20, max(16 << 20, 5 * block_bytes + (2 << 20))))

    grid = (B // bt, HW // hwt)

    # ---- Pass 1: pooled per-channel scale, lane-dense (B, 1, C) ----
    scale_row = pl.pallas_call(
        functools.partial(_pool_fc_kernel, inv_hw=1.0 / float(HW)),
        out_shape=jax.ShapeDtypeStruct((B, 1, C), jnp.float32),
        grid_spec=pltpu.PrefetchScalarGridSpec(
            num_scalar_prefetch=0,
            grid=grid,
            in_specs=[
                pl.BlockSpec((bt, C, hwt), lambda b, h: (b, 0, h)),   # x tile
                pl.BlockSpec((Cr, C), lambda b, h: (0, 0)),           # W1
                pl.BlockSpec((1, Cr), lambda b, h: (0, 0)),           # b1
                pl.BlockSpec((C, Cr), lambda b, h: (0, 0)),           # W2
                pl.BlockSpec((1, C), lambda b, h: (0, 0)),            # b2
            ],
            out_specs=pl.BlockSpec((bt, 1, C), lambda b, h: (b, 0, 0)),
            scratch_shapes=[pltpu.VMEM((bt, C), jnp.float32)],
        ),
        compiler_params=pltpu.CompilerParams(
            dimension_semantics=("parallel", "arbitrary"),
            vmem_limit_bytes=vmem_limit),
    )(x_flat, w1f, b1r, w2f, b2r)

    # (B, 1, C) and (B, C, 1) share the same row-major element order.
    scale_col = scale_row.reshape(B, C, 1)

    # ---- Pass 2: elementwise per-channel scale ----
    out_flat = pl.pallas_call(
        _scale_kernel,
        out_shape=jax.ShapeDtypeStruct((B, C, HW), x.dtype),
        grid_spec=pltpu.PrefetchScalarGridSpec(
            num_scalar_prefetch=0,
            grid=grid,
            in_specs=[
                pl.BlockSpec((bt, C, hwt), lambda b, h: (b, 0, h)),   # x tile
                pl.BlockSpec((bt, C, 1), lambda b, h: (b, 0, 0)),     # scale
            ],
            out_specs=pl.BlockSpec((bt, C, hwt), lambda b, h: (b, 0, h)),
        ),
        compiler_params=pltpu.CompilerParams(
            dimension_semantics=("parallel", "parallel"),
            vmem_limit_bytes=vmem_limit),
    )(x_flat, scale_col)

    return out_flat.reshape(B, C, H, W)


# ----------------------------------------------------------------------------
# Pure-JAX reference mirroring the PyTorch forward.
# ----------------------------------------------------------------------------
def ca_layer_reference(x, w1, b1, w2, b2):
    y = jnp.mean(x.astype(jnp.float32), axis=(2, 3), keepdims=True)   # (B,C,1,1)
    y = jnp.einsum('rc,bcij->brij', w1, y) + b1[None, :, None, None]
    y = jnp.maximum(y, 0.0)
    y = jnp.einsum('cr,brij->bcij', w2, y) + b2[None, :, None, None]
    y = jax.nn.sigmoid(y)
    return (x * y).astype(x.dtype)


if __name__ == "__main__":
    # Small shapes consistent with the module: channel divisible by reduction=16.
    B, C, H, W = 2, 32, 16, 16
    reduction = 16
    Cr = C // reduction

    key = jax.random.PRNGKey(0)
    kx, k1, k2, k3, k4 = jax.random.split(key, 5)

    x = jax.random.normal(kx, (B, C, H, W), dtype=jnp.float32)
    w1 = 0.1 * jax.random.normal(k1, (Cr, C), dtype=jnp.float32)   # C -> C/r
    b1 = 0.1 * jax.random.normal(k2, (Cr,), dtype=jnp.float32)
    w2 = 0.1 * jax.random.normal(k3, (C, Cr), dtype=jnp.float32)   # C/r -> C
    b2 = 0.1 * jax.random.normal(k4, (C,), dtype=jnp.float32)

    out = ca_layer(x, w1, b1, w2, b2)
    out = jax.block_until_ready(out)

    ref = ca_layer_reference(x, w1, b1, w2, b2)
    assert out.shape == (B, C, H, W)
    assert jnp.allclose(out, ref, atol=1e-5, rtol=1e-5), "mismatch vs reference"

    print("KERNEL_OK")
</pallas_src>

<mosaic_0001>
module attributes {stable_mosaic.version = 11 : i64} {
  func.func @_pool_fc_kernel(%arg0: i32, %arg1: i32, %arg2: memref<2x32x256xf32, #tpu.memory_space<vmem>>, %arg3: memref<2x32xf32, #tpu.memory_space<vmem>>, %arg4: memref<1x2xf32, #tpu.memory_space<vmem>>, %arg5: memref<32x2xf32, #tpu.memory_space<vmem>>, %arg6: memref<1x32xf32, #tpu.memory_space<vmem>>, %arg7: memref<2x1x32xf32, #tpu.memory_space<vmem>>, %arg8: memref<2x32xf32, #tpu.memory_space<vmem>>) attributes {dimension_semantics = [#tpu.dimension_semantics<parallel>, #tpu.dimension_semantics<arbitrary>], iteration_bounds = array<i64: 1, 1>, scalar_prefetch = 0 : i64, scratch_operands = 1 : i64, tpu.core_type = #tpu.core_type<tc>, window_params = [{transform_indices = @transform_0, window_bounds = array<i64: 2, 32, 256>}, {pipeline_mode = #tpu.pipeline_mode<synchronous>, transform_indices = @transform_1, window_bounds = array<i64: 2, 32>}, {pipeline_mode = #tpu.pipeline_mode<synchronous>, transform_indices = @transform_2, window_bounds = array<i64: 1, 2>}, {pipeline_mode = #tpu.pipeline_mode<synchronous>, transform_indices = @transform_3, window_bounds = array<i64: 32, 2>}, {pipeline_mode = #tpu.pipeline_mode<synchronous>, transform_indices = @transform_4, window_bounds = array<i64: 1, 32>}, {transform_indices = @transform_5, window_bounds = array<i64: 2, 1, 32>}]} {
    %c0_i32 = arith.constant 0 : i32
    %0 = arith.cmpi eq, %arg1, %c0_i32 : i32
    %1 = arith.extui %0 : i1 to i32
    %c0_i32_0 = arith.constant 0 : i32
    %2 = arith.cmpi ne, %1, %c0_i32_0 : i32
    scf.if %2 {
      %cst_9 = arith.constant 0.000000e+00 : f32
      %11 = vector.broadcast %cst_9 : f32 to vector<2x32xf32>
      %c0_10 = arith.constant 0 : index
      %c0_11 = arith.constant 0 : index
      %12 = vector.load %arg8[%c0_10, %c0_11] : memref<2x32xf32, #tpu.memory_space<vmem>>, vector<2x32xf32>
      tpu.vector_store %arg8[%c0_10, %c0_11], %11 {strides = array<i32>} : memref<2x32xf32, #tpu.memory_space<vmem>>, vector<2x32xf32>,
    } else {
    }
    %c0 = arith.constant 0 : index
    %c0_1 = arith.constant 0 : index
    %3 = vector.load %arg8[%c0, %c0_1] : memref<2x32xf32, #tpu.memory_space<vmem>>, vector<2x32xf32>
    %c0_2 = arith.constant 0 : index
    %c0_3 = arith.constant 0 : index
    %c0_4 = arith.constant 0 : index
    %4 = vector.load %arg2[%c0_2, %c0_3, %c0_4] : memref<2x32x256xf32, #tpu.memory_space<vmem>>, vector<2x32x256xf32>
    %cst = arith.constant dense<0.000000e+00> : vector<2x32xf32>
    %5 = vector.multi_reduction <add>, %4, %cst [2] : vector<2x32x256xf32> to vector<2x32xf32>
    %6 = arith.addf %3, %5 : vector<2x32xf32>
    %c0_5 = arith.constant 0 : index
    %c0_6 = arith.constant 0 : index
    %7 = vector.load %arg8[%c0_5, %c0_6] : memref<2x32xf32, #tpu.memory_space<vmem>>, vector<2x32xf32>
    tpu.vector_store %arg8[%c0_5, %c0_6], %6 {strides = array<i32>} : memref<2x32xf32, #tpu.memory_space<vmem>>, vector<2x32xf32>,
    %c0_i32_7 = arith.constant 0 : i32
    %8 = arith.cmpi eq, %arg1, %c0_i32_7 : i32
    %9 = arith.extui %8 : i1 to i32
    %c0_i32_8 = arith.constant 0 : i32
    %10 = arith.cmpi ne, %9, %c0_i32_8 : i32
    scf.if %10 {
      %c0_9 = arith.constant 0 : index
      %c0_10 = arith.constant 0 : index
      %11 = vector.load %arg8[%c0_9, %c0_10] : memref<2x32xf32, #tpu.memory_space<vmem>>, vector<2x32xf32>
      %cst_11 = arith.constant 3.906250e-03 : f32
      %12 = vector.broadcast %cst_11 : f32 to vector<2x32xf32>
      %13 = arith.mulf %11, %12 : vector<2x32xf32>
      %14 = vector.shape_cast %13 : vector<2x32xf32> to vector<2x1x32xf32>
      %c0_12 = arith.constant 0 : index
      %c0_13 = arith.constant 0 : index
      %15 = vector.load %arg3[%c0_12, %c0_13] : memref<2x32xf32, #tpu.memory_space<vmem>>, vector<2x32xf32>
      %16 = vector.shape_cast %15 : vector<2x32xf32> to vector<1x2x32xf32>
      %17 = vector.broadcast %14 : vector<2x1x32xf32> to vector<2x2x32xf32>
      %18 = vector.broadcast %16 : vector<1x2x32xf32> to vector<2x2x32xf32>
      %19 = arith.mulf %17, %18 : vector<2x2x32xf32>
      %cst_14 = arith.constant dense<0.000000e+00> : vector<2x2xf32>
      %20 = vector.multi_reduction <add>, %19, %cst_14 [2] : vector<2x2x32xf32> to vector<2x2xf32>
      %c0_15 = arith.constant 0 : index
      %c0_16 = arith.constant 0 : index
      %21 = vector.load %arg4[%c0_15, %c0_16] : memref<1x2xf32, #tpu.memory_space<vmem>>, vector<1x2xf32>
      %22 = vector.broadcast %21 : vector<1x2xf32> to vector<2x2xf32>
      %23 = arith.addf %20, %22 : vector<2x2xf32>
      %cst_17 = arith.constant 0.000000e+00 : f32
      %24 = vector.broadcast %cst_17 : f32 to vector<2x2xf32>
      %25 = arith.maximumf %23, %24 : vector<2x2xf32>
      %26 = vector.shape_cast %25 : vector<2x2xf32> to vector<2x1x2xf32>
      %c0_18 = arith.constant 0 : index
      %c0_19 = arith.constant 0 : index
      %27 = vector.load %arg5[%c0_18, %c0_19] : memref<32x2xf32, #tpu.memory_space<vmem>>, vector<32x2xf32>
      %28 = vector.shape_cast %27 : vector<32x2xf32> to vector<1x32x2xf32>
      %29 = vector.broadcast %26 : vector<2x1x2xf32> to vector<2x32x2xf32>
      %30 = vector.broadcast %28 : vector<1x32x2xf32> to vector<2x32x2xf32>
      %31 = arith.mulf %29, %30 : vector<2x32x2xf32>
      %cst_20 = arith.constant dense<0.000000e+00> : vector<2x32xf32>
      %32 = vector.multi_reduction <add>, %31, %cst_20 [2] : vector<2x32x2xf32> to vector<2x32xf32>
      %c0_21 = arith.constant 0 : index
      %c0_22 = arith.constant 0 : index
      %33 = vector.load %arg6[%c0_21, %c0_22] : memref<1x32xf32, #tpu.memory_space<vmem>>, vector<1x32xf32>
      %34 = vector.broadcast %33 : vector<1x32xf32> to vector<2x32xf32>
      %35 = arith.addf %32, %34 : vector<2x32xf32>
      %36 = arith.negf %35 : vector<2x32xf32>
      %37 = math.exp %36 : vector<2x32xf32>
      %cst_23 = arith.constant 1.000000e+00 : f32
      %38 = vector.broadcast %cst_23 : f32 to vector<2x32xf32>
      %39 = arith.addf %38, %37 : vector<2x32xf32>
      %40 = arith.divf %38, %39 : vector<2x32xf32>
      %41 = vector.shape_cast %40 : vector<2x32xf32> to vector<2x1x32xf32>
      %c0_24 = arith.constant 0 : index
      %c0_25 = arith.constant 0 : index
      %c0_26 = arith.constant 0 : index
      %42 = vector.load %arg7[%c0_24, %c0_25, %c0_26] : memref<2x1x32xf32, #tpu.memory_space<vmem>>, vector<2x1x32xf32>
      tpu.vector_store %arg7[%c0_24, %c0_25, %c0_26], %41 {strides = array<i32>} : memref<2x1x32xf32, #tpu.memory_space<vmem>>, vector<2x1x32xf32>,
    } else {
    }
    return
  }
  func.func @transform_0(%arg0: i32, %arg1: i32) -> (i32, i32, i32) {
    %c0_i32 = arith.constant 0 : i32
    %c0_i32_0 = arith.constant 0 : i32
    return %arg0, %c0_i32, %arg1 : i32, i32, i32
  }
  func.func @transform_1(%arg0: i32, %arg1: i32) -> (i32, i32) {
    %c0_i32 = arith.constant 0 : i32
    %c0_i32_0 = arith.constant 0 : i32
    %c0_i32_1 = arith.constant 0 : i32
    return %c0_i32, %c0_i32_0 : i32, i32
  }
  func.func @transform_2(%arg0: i32, %arg1: i32) -> (i32, i32) {
    %c0_i32 = arith.constant 0 : i32
    %c0_i32_0 = arith.constant 0 : i32
    %c0_i32_1 = arith.constant 0 : i32
    return %c0_i32, %c0_i32_0 : i32, i32
  }
  func.func @transform_3(%arg0: i32, %arg1: i32) -> (i32, i32) {
    %c0_i32 = arith.constant 0 : i32
    %c0_i32_0 = arith.constant 0 : i32
    %c0_i32_1 = arith.constant 0 : i32
    return %c0_i32, %c0_i32_0 : i32, i32
  }
  func.func @transform_4(%arg0: i32, %arg1: i32) -> (i32, i32) {
    %c0_i32 = arith.constant 0 : i32
    %c0_i32_0 = arith.constant 0 : i32
    %c0_i32_1 = arith.constant 0 : i32
    return %c0_i32, %c0_i32_0 : i32, i32
  }
  func.func @transform_5(%arg0: i32, %arg1: i32) -> (i32, i32, i32) {
    %c0_i32 = arith.constant 0 : i32
    %c0_i32_0 = arith.constant 0 : i32
    %c0_i32_1 = arith.constant 0 : i32
    return %arg0, %c0_i32, %c0_i32_0 : i32, i32, i32
  }
}

</mosaic_0001>

<llo_original>
// kernel: tpu_custom_call.1
$region0: #{tpu_custom_call.1}
  #allocation0 [shape = 'u32[]', space=smem, size = 0x4, offset = 0x4, fixed_abs, tag = 'smem constant byte address 0x4 - core index']
  #allocation1 [shape = 'u32[144,128]{1,0:T(1,128)}', space=vmem, size = 0x12000, scoped, tag = 'internal scratch']
  #allocation2 [shape = 'f32[2,32]{1,0:T(2,128)}', space=vmem, size = 0x400, scoped, tag = 'scratch operand']
  %s0 = inlined_call_operand.hbm [shape: f32[2,32,256], index: 0, kind: input, shape index: {}]
  %s1 = inlined_call_operand.vmem [shape: f32[2,32], index: 1, kind: input, shape index: {}]
  %s2 = inlined_call_operand.vmem [shape: f32[1,2], index: 2, kind: input, shape index: {}]
  %s3 = inlined_call_operand.vmem [shape: f32[32,2], index: 3, kind: input, shape index: {}]
  %s4 = inlined_call_operand.vmem [shape: f32[1,32], index: 4, kind: input, shape index: {}]
  %s5 = inlined_call_operand.hbm [shape: f32[2,1,32], index: 5, kind: output, shape index: {}]
  %s6 = sld [smem:[#allocation0]]
  $region42: #{tpu_custom_call.1} parent=0
    _
  %s8 = ssub.s32 1, %s6
  %s9 = scalar_select 0, %s8, %s6
  $region1: #{tpu_custom_call.1} parent=0
    #allocation3 [shape = 'u8[65536]{0}', space=vmem, size = 0x10000, scoped, tag = 'input window, operand 0, single buffered']
    #allocation4 [shape = 's32[1]{0}', space=sflag, size = 0x4, scoped, tag = 'scoped memory for tpu_custom_call.1']
    #allocation5 [shape = 's32[1]{0}', space=sflag, size = 0x4, scoped, tag = 'scoped memory for tpu_custom_call.1']
    #allocation6 [shape = 'u8[1024]{0}', space=vmem, size = 0x400, scoped, tag = 'output window, operand 0, single buffered']
    %10 = vsyncpa [#allocation4], 0
    %11 = vsyncpa [#allocation5], 0
    // Predicated region
    $region2: #{tpu_custom_call.1} parent=1 // pred_check
      _
    $region3: #{tpu_custom_call.1} parent=1 // pred_check_branch
      %13 = sbr.rel (0) target = $region5
    $region4: #{tpu_custom_call.1} parent=1 // pred_region
      %s15 = ssub.s32 2048, 2048
      %16 = vsyncadd [#allocation4], %s15
      %s17 = sshll.u32 [#allocation3], 4
      %s18 = int_to_ptr.vmem [resolvable:$true] %s17
      %23 = dma.hbm_to_vmem [thread:$0]  %s0, 2048, %s18, [#allocation4], 256, 256, 16
    $region5: #{tpu_custom_call.1} parent=1 // pred_fallthru
      _
    // Predicated region
    $region6: #{tpu_custom_call.1} parent=1 // pred_check
      _
    $region7: #{tpu_custom_call.1} parent=1 // pred_check_branch
      %25 = sbr.rel (0) target = $region9
    $region8: #{tpu_custom_call.1} parent=1 // pred_region
      _
    $region9: #{tpu_custom_call.1} parent=1 // pred_fallthru
      _
    // Predicated region
    $region10: #{tpu_custom_call.1} parent=1 // pred_check
      _
    $region11: #{tpu_custom_call.1} parent=1 // pred_check_branch
      %27 = sbr.rel (0) target = $region13
    $region12: #{tpu_custom_call.1} parent=1 // pred_region
      _
    $region13: #{tpu_custom_call.1} parent=1 // pred_fallthru
      _
    // Predicated region
    $region14: #{tpu_custom_call.1} parent=1 // pred_check
      _
    $region15: #{tpu_custom_call.1} parent=1 // pred_check_branch
      %29 = sbr.rel (0) target = $region17
    $region16: #{tpu_custom_call.1} parent=1 // pred_region
      _
    $region17: #{tpu_custom_call.1} parent=1 // pred_fallthru
      _
    // Predicated region
    $region18: #{tpu_custom_call.1} parent=1 // pred_check
      _
    $region19: #{tpu_custom_call.1} parent=1 // pred_check_branch
      %31 = sbr.rel (0) target = $region21
    $region20: #{tpu_custom_call.1} parent=1 // pred_region
      _
    $region21: #{tpu_custom_call.1} parent=1 // pred_fallthru
      _
    // Predicated region
    $region22: #{tpu_custom_call.1} parent=1 // pred_check
      _
    $region23: #{tpu_custom_call.1} parent=1 // pred_check_branch
      %33 = sbr.rel (0) target = $region25
    $region24: #{tpu_custom_call.1} parent=1 // pred_region
      %34 = dma.done [#allocation4], 2048
    $region25: #{tpu_custom_call.1} parent=1 // pred_fallthru
      _
    %p35 = scmp.eq.s32.totalorder 0, 0
    // Predicated region
    $region26: #{tpu_custom_call.1} parent=1 // pred_check
      %p36 = pneg %p35
    $region27: #{tpu_custom_call.1} parent=1 // pred_check_branch
      %38 = sbr.rel (%p36) target = $region29
    $region28: #{tpu_custom_call.1} parent=1 // pred_region
      %vm39 = vcmask 254976
      %40 = vst.msk [vmem:[#allocation2] sm:$0x3] %vm39, 0.0
    $region29: #{tpu_custom_call.1} parent=1 // pred_fallthru
      _
    %v41 = vld [vmem:[#allocation2] sm:$0x3]
    %v42 = vld [vmem:[#allocation3] sm:$0xff]
    %v43 = vld [vmem:[#allocation3 + $0x8] sm:$0xff]
    %v44 = vld [vmem:[#allocation3 + $0x10] sm:$0xff]
    %v45 = vld [vmem:[#allocation3 + $0x18] sm:$0xff]
    %v46 = vld [vmem:[#allocation3 + $0x20] sm:$0xff]
    %v47 = vld [vmem:[#allocation3 + $0x28] sm:$0xff]
    %v48 = vld [vmem:[#allocation3 + $0x30] sm:$0xff]
    %v49 = vld [vmem:[#allocation3 + $0x38] sm:$0xff]
    %v50 = vld [vmem:[#allocation3 + $0x40] sm:$0xff]
    %v51 = vld [vmem:[#allocation3 + $0x48] sm:$0xff]
    %v52 = vld [vmem:[#allocation3 + $0x50] sm:$0xff]
    %v53 = vld [vmem:[#allocation3 + $0x58] sm:$0xff]
    %v54 = vld [vmem:[#allocation3 + $0x60] sm:$0xff]
    %v55 = vld [vmem:[#allocation3 + $0x68] sm:$0xff]
    %v56 = vld [vmem:[#allocation3 + $0x70] sm:$0xff]
    %v57 = vld [vmem:[#allocation3 + $0x78] sm:$0xff]
    %v58 = vadd.f32 %v42, %v43
    %59 = vadd.xlane.f32.xlu0 %v58
    %v60 = vpop.xlane.xlu0 %59
    %v61 = vadd.f32 %v44, %v45
    %62 = vadd.xlane.f32.xlu0 %v61
    %v63 = vpop.xlane.xlu0 %62
    %v64 = vadd.f32 %v46, %v47
    %65 = vadd.xlane.f32.xlu0 %v64
    %v66 = vpop.xlane.xlu0 %65
    %v67 = vadd.f32 %v48, %v49
    %68 = vadd.xlane.f32.xlu0 %v67
    %v69 = vpop.xlane.xlu0 %68
    %v70 = vadd.f32 %v50, %v51
    %71 = vadd.xlane.f32.xlu0 %v70
    %v72 = vpop.xlane.xlu0 %71
    %v73 = vadd.f32 %v52, %v53
    %74 = vadd.xlane.f32.xlu0 %v73
    %v75 = vpop.xlane.xlu0 %74
    %v76 = vadd.f32 %v54, %v55
    %77 = vadd.xlane.f32.xlu0 %v76
    %v78 = vpop.xlane.xlu0 %77
    %v79 = vadd.f32 %v56, %v57
    %80 = vadd.xlane.f32.xlu0 %v79
    %v81 = vpop.xlane.xlu0 %80
    %v90 = vlaneseq
    %v91 = vand.u32 %v90, 127
    %v92 = vlaneseq
    %v93 = vshrl.u32 %v92, 7
    %v94 = vsub.s32 %v91, %v93
    %v95 = vrot.slane %v60, %v94
    %v96 = vadd.s32 %v91, 4294967288
    %v97 = vlaneseq
    %v98 = vshrl.u32 %v97, 7
    %v99 = vsub.s32 %v96, %v98
    %v100 = vrot.slane %v63, %v99
    %vm101 = vcmask 130112
    %v102 = vsel %vm101, %v100, %v95
    %v103 = vadd.s32 %v91, 4294967280
    %v104 = vlaneseq
    %v105 = vshrl.u32 %v104, 7
    %v106 = vsub.s32 %v103, %v105
    %v107 = vrot.slane %v66, %v106
    %vm108 = vcmask 195712
    %v109 = vsel %vm108, %v107, %v102
    %v110 = vadd.s32 %v91, 4294967272
    %v111 = vlaneseq
    %v112 = vshrl.u32 %v111, 7
    %v113 = vsub.s32 %v110, %v112
    %v114 = vrot.slane %v69, %v113
    %vm115 = vcmask 261312
    %v116 = vsel %vm115, %v114, %v109
    %v117 = vlaneseq
    %v118 = vshrl.u32 %v117, 7
    %v119 = vsub.s32 %v91, %v118
    %v120 = vrot.slane %v72, %v119
    %v121 = vlaneseq
    %v122 = vshrl.u32 %v121, 7
    %v123 = vsub.s32 %v96, %v122
    %v124 = vrot.slane %v75, %v123
    %v125 = vsel %vm101, %v124, %v120
    %v126 = vlaneseq
    %v127 = vshrl.u32 %v126, 7
    %v128 = vsub.s32 %v103, %v127
    %v129 = vrot.slane %v78, %v128
    %v130 = vsel %vm108, %v129, %v125
    %v131 = vlaneseq
    %v132 = vshrl.u32 %v131, 7
    %v133 = vsub.s32 %v110, %v132
    %v134 = vrot.slane %v81, %v133
    %v135 = vsel %vm115, %v134, %v130
    %vm136 = vcmask 1041409
    %v137 = vsel %vm136, %v135, %v116
    %v139 = vadd.f32 %v41, %v137
    %vm140 = vcmask 254976
    %141 = vst.msk [vmem:[#allocation2] sm:$0x3] %vm140, %v139
    // Predicated region
    $region30: #{tpu_custom_call.1} parent=1 // pred_check
      %p142 = pneg %p35
    $region31: #{tpu_custom_call.1} parent=1 // pred_check_branch
      %144 = sbr.rel (%p142) target = $region33
    $region32: #{tpu_custom_call.1} parent=1 // pred_region
      %v145 = vld [vmem:[#allocation2] sm:$0x3]
      %v146 = vmul.f32 %v145, 0.00390625
      %v149 = vunpack.c.l.s4 1966171168
      %v150 = vunpack.c.0.s8 %v149
      %v151 = vlaneseq
      %v152 = vshrl.u32 %v151, 7
      %v153 = vsub.s32 %v150, %v152
      %v154 = vrot.slane %v146, %v153
      %v155 = vcombine.high %v154, %v154
      %v157 = vunpack.c.l.s4 1966171168
      %v158 = vunpack.c.0.s8 %v157
      %v159 = vlaneseq
      %v160 = vshrl.u32 %v159, 7
      %v161 = vsub.s32 %v158, %v160
      %v162 = vrot.slane %v154, %v161
      %v164 = vunpack.c.l.s4 1966171168
      %v165 = vunpack.c.0.s8 %v164
      %v166 = vlaneseq
      %v167 = vshrl.u32 %v166, 7
      %v168 = vsub.s32 %v165, %v167
      %v169 = vrot.slane %v155, %v168
      %v170 = vld [vmem:[%s1] sm:$0x3]
      %v171 = vlaneseq
      %v172 = vshrl.u32 %v171, 7
      %v173 = vsub.s32 0, %v172
      %v174 = vrot.slane %v162, %v173
      %v175 = vlaneseq
      %v176 = vshrl.u32 %v175, 7
      %v177 = vsub.s32 0, %v176
      %v178 = vrot.slane %v169, %v177
      %v181 = vmul.f32 %v174, %v170
      %v182 = vmul.f32 %v178, %v170
      %v183 = vsel %vm140, %v181, 0.0
      %184 = vadd.xlane.f32.xlu0 %v183
      %v185 = vpop.xlane.xlu0 %184
      %v186 = vsel %vm140, %v182, 0.0
      %187 = vadd.xlane.f32.xlu0 %v186
      %v188 = vpop.xlane.xlu0 %187
      %v189 = vld [vmem:[%s2] sm:$0x1]
      %v191 = vlaneseq
      %v192 = vshrl.u32 %v191, 7
      %v193 = vsub.s32 0, %v192
      %v194 = vrot.slane %v189, %v193
      %196 = vbcast.lane.b32.xlu0 %v194, 256
      %v197 = vpop.permute.xlu0 %196
      %v199 = vadd.f32 %v185, %v197
      %v200 = vadd.f32 %v188, %v197
      %v201 = vmax.f32 %v199, 0.0
      %v202 = vmax.f32 %v200, 0.0
      %v203 = vld [vmem:[%s3] sm:$0xff]
      %v204 = vld [vmem:[%s3 + $0x8] sm:$0xff]
      %v205 = vld [vmem:[%s3 + $0x10] sm:$0xff]
      %v206 = vld [vmem:[%s3 + $0x18] sm:$0xff]
      %v211 = vlaneseq
      %v212 = vshrl.u32 %v211, 7
      %v213 = vsub.s32 0, %v212
      %v214 = vrot.slane %v203, %v213
      %216 = vbcast.lane.b32.xlu0 %v214, 256
      %v217 = vpop.permute.xlu0 %216
      %v218 = vlaneseq
      %v219 = vshrl.u32 %v218, 7
      %v220 = vsub.s32 1, %v219
      %v221 = vrot.slane %v203, %v220
      %223 = vbcast.lane.b32.xlu0 %v221, 256
      %v224 = vpop.permute.xlu0 %223
      %v225 = vlaneseq
      %v226 = vshrl.u32 %v225, 7
      %v227 = vsub.s32 2, %v226
      %v228 = vrot.slane %v203, %v227
      %230 = vbcast.lane.b32.xlu0 %v228, 256
      %v231 = vpop.permute.xlu0 %230
      %v232 = vlaneseq
      %v233 = vshrl.u32 %v232, 7
      %v234 = vsub.s32 3, %v233
      %v235 = vrot.slane %v203, %v234
      %237 = vbcast.lane.b32.xlu0 %v235, 256
      %v238 = vpop.permute.xlu0 %237
      %v239 = vlaneseq
      %v240 = vshrl.u32 %v239, 7
      %v241 = vsub.s32 4, %v240
      %v242 = vrot.slane %v203, %v241
      %244 = vbcast.lane.b32.xlu0 %v242, 256
      %v245 = vpop.permute.xlu0 %244
      %v246 = vlaneseq
      %v247 = vshrl.u32 %v246, 7
      %v248 = vsub.s32 5, %v247
      %v249 = vrot.slane %v203, %v248
      %251 = vbcast.lane.b32.xlu0 %v249, 256
      %v252 = vpop.permute.xlu0 %251
      %v253 = vlaneseq
      %v254 = vshrl.u32 %v253, 7
      %v255 = vsub.s32 6, %v254
      %v256 = vrot.slane %v203, %v255
      %258 = vbcast.lane.b32.xlu0 %v256, 256
      %v259 = vpop.permute.xlu0 %258
      %v260 = vlaneseq
      %v261 = vshrl.u32 %v260, 7
      %v262 = vsub.s32 7, %v261
      %v263 = vrot.slane %v203, %v262
      %265 = vbcast.lane.b32.xlu0 %v263, 256
      %v266 = vpop.permute.xlu0 %265
      %v267 = vlaneseq
      %v268 = vshrl.u32 %v267, 7
      %v269 = vsub.s32 0, %v268
      %v270 = vrot.slane %v204, %v269
      %272 = vbcast.lane.b32.xlu0 %v270, 256
      %v273 = vpop.permute.xlu0 %272
      %v274 = vlaneseq
      %v275 = vshrl.u32 %v274, 7
      %v276 = vsub.s32 1, %v275
      %v277 = vrot.slane %v204, %v276
      %279 = vbcast.lane.b32.xlu0 %v277, 256
      %v280 = vpop.permute.xlu0 %279
      %v281 = vlaneseq
      %v282 = vshrl.u32 %v281, 7
      %v283 = vsub.s32 2, %v282
      %v284 = vrot.slane %v204, %v283
      %286 = vbcast.lane.b32.xlu0 %v284, 256
      %v287 = vpop.permute.xlu0 %286
      %v288 = vlaneseq
      %v289 = vshrl.u32 %v288, 7
      %v290 = vsub.s32 3, %v289
      %v291 = vrot.slane %v204, %v290
      %293 = vbcast.lane.b32.xlu0 %v291, 256
      %v294 = vpop.permute.xlu0 %293
      %v295 = vlaneseq
      %v296 = vshrl.u32 %v295, 7
      %v297 = vsub.s32 4, %v296
      %v298 = vrot.slane %v204, %v297
      %300 = vbcast.lane.b32.xlu0 %v298, 256
      %v301 = vpop.permute.xlu0 %300
      %v302 = vlaneseq
      %v303 = vshrl.u32 %v302, 7
      %v304 = vsub.s32 5, %v303
      %v305 = vrot.slane %v204, %v304
      %307 = vbcast.lane.b32.xlu0 %v305, 256
      %v308 = vpop.permute.xlu0 %307
      %v309 = vlaneseq
      %v310 = vshrl.u32 %v309, 7
      %v311 = vsub.s32 6, %v310
      %v312 = vrot.slane %v204, %v311
      %314 = vbcast.lane.b32.xlu0 %v312, 256
      %v315 = vpop.permute.xlu0 %314
      %v316 = vlaneseq
      %v317 = vshrl.u32 %v316, 7
      %v318 = vsub.s32 7, %v317
      %v319 = vrot.slane %v204, %v318
      %321 = vbcast.lane.b32.xlu0 %v319, 256
      %v322 = vpop.permute.xlu0 %321
      %v323 = vlaneseq
      %v324 = vshrl.u32 %v323, 7
      %v325 = vsub.s32 0, %v324
      %v326 = vrot.slane %v205, %v325
      %328 = vbcast.lane.b32.xlu0 %v326, 256
      %v329 = vpop.permute.xlu0 %328
      %v330 = vlaneseq
      %v331 = vshrl.u32 %v330, 7
      %v332 = vsub.s32 1, %v331
      %v333 = vrot.slane %v205, %v332
      %335 = vbcast.lane.b32.xlu0 %v333, 256
      %v336 = vpop.permute.xlu0 %335
      %v337 = vlaneseq
      %v338 = vshrl.u32 %v337, 7
      %v339 = vsub.s32 2, %v338
      %v340 = vrot.slane %v205, %v339
      %342 = vbcast.lane.b32.xlu0 %v340, 256
      %v343 = vpop.permute.xlu0 %342
      %v344 = vlaneseq
      %v345 = vshrl.u32 %v344, 7
      %v346 = vsub.s32 3, %v345
      %v347 = vrot.slane %v205, %v346
      %349 = vbcast.lane.b32.xlu0 %v347, 256
      %v350 = vpop.permute.xlu0 %349
      %v351 = vlaneseq
      %v352 = vshrl.u32 %v351, 7
      %v353 = vsub.s32 4, %v352
      %v354 = vrot.slane %v205, %v353
      %356 = vbcast.lane.b32.xlu0 %v354, 256
      %v357 = vpop.permute.xlu0 %356
      %v358 = vlaneseq
      %v359 = vshrl.u32 %v358, 7
      %v360 = vsub.s32 5, %v359
      %v361 = vrot.slane %v205, %v360
      %363 = vbcast.lane.b32.xlu0 %v361, 256
      %v364 = vpop.permute.xlu0 %363
      %v365 = vlaneseq
      %v366 = vshrl.u32 %v365, 7
      %v367 = vsub.s32 6, %v366
      %v368 = vrot.slane %v205, %v367
      %370 = vbcast.lane.b32.xlu0 %v368, 256
      %v371 = vpop.permute.xlu0 %370
      %v372 = vlaneseq
      %v373 = vshrl.u32 %v372, 7
      %v374 = vsub.s32 7, %v373
      %v375 = vrot.slane %v205, %v374
      %377 = vbcast.lane.b32.xlu0 %v375, 256
      %v378 = vpop.permute.xlu0 %377
      %v379 = vlaneseq
      %v380 = vshrl.u32 %v379, 7
      %v381 = vsub.s32 0, %v380
      %v382 = vrot.slane %v206, %v381
      %384 = vbcast.lane.b32.xlu0 %v382, 256
      %v385 = vpop.permute.xlu0 %384
      %v386 = vlaneseq
      %v387 = vshrl.u32 %v386, 7
      %v388 = vsub.s32 1, %v387
      %v389 = vrot.slane %v206, %v388
      %391 = vbcast.lane.b32.xlu0 %v389, 256
      %v392 = vpop.permute.xlu0 %391
      %v393 = vlaneseq
      %v394 = vshrl.u32 %v393, 7
      %v395 = vsub.s32 2, %v394
      %v396 = vrot.slane %v206, %v395
      %398 = vbcast.lane.b32.xlu0 %v396, 256
      %v399 = vpop.permute.xlu0 %398
      %v400 = vlaneseq
      %v401 = vshrl.u32 %v400, 7
      %v402 = vsub.s32 3, %v401
      %v403 = vrot.slane %v206, %v402
      %405 = vbcast.lane.b32.xlu0 %v403, 256
      %v406 = vpop.permute.xlu0 %405
      %v407 = vlaneseq
      %v408 = vshrl.u32 %v407, 7
      %v409 = vsub.s32 4, %v408
      %v410 = vrot.slane %v206, %v409
      %412 = vbcast.lane.b32.xlu0 %v410, 256
      %v413 = vpop.permute.xlu0 %412
      %v414 = vlaneseq
      %v415 = vshrl.u32 %v414, 7
      %v416 = vsub.s32 5, %v415
      %v417 = vrot.slane %v206, %v416
      %419 = vbcast.lane.b32.xlu0 %v417, 256
      %v420 = vpop.permute.xlu0 %419
      %v421 = vlaneseq
      %v422 = vshrl.u32 %v421, 7
      %v423 = vsub.s32 6, %v422
      %v424 = vrot.slane %v206, %v423
      %426 = vbcast.lane.b32.xlu0 %v424, 256
      %v427 = vpop.permute.xlu0 %426
      %v428 = vlaneseq
      %v429 = vshrl.u32 %v428, 7
      %v430 = vsub.s32 7, %v429
      %v431 = vrot.slane %v206, %v430
      %433 = vbcast.lane.b32.xlu0 %v431, 256
      %v434 = vpop.permute.xlu0 %433
      %v467 = vmul.f32 %v201, %v217
      %v468 = vmul.f32 %v201, %v224
      %v469 = vmul.f32 %v201, %v231
      %v470 = vmul.f32 %v201, %v238
      %v471 = vmul.f32 %v201, %v245
      %v472 = vmul.f32 %v201, %v252
      %v473 = vmul.f32 %v201, %v259
      %v474 = vmul.f32 %v201, %v266
      %v475 = vmul.f32 %v201, %v273
      %v476 = vmul.f32 %v201, %v280
      %v477 = vmul.f32 %v201, %v287
      %v478 = vmul.f32 %v201, %v294
      %v479 = vmul.f32 %v201, %v301
      %v480 = vmul.f32 %v201, %v308
      %v481 = vmul.f32 %v201, %v315
      %v482 = vmul.f32 %v201, %v322
      %v483 = vmul.f32 %v201, %v329
      %v484 = vmul.f32 %v201, %v336
      %v485 = vmul.f32 %v201, %v343
      %v486 = vmul.f32 %v201, %v350
      %v487 = vmul.f32 %v201, %v357
      %v488 = vmul.f32 %v201, %v364
      %v489 = vmul.f32 %v201, %v371
      %v490 = vmul.f32 %v201, %v378
      %v491 = vmul.f32 %v201, %v385
      %v492 = vmul.f32 %v201, %v392
      %v493 = vmul.f32 %v201, %v399
      %v494 = vmul.f32 %v201, %v406
      %v495 = vmul.f32 %v201, %v413
      %v496 = vmul.f32 %v201, %v420
      %v497 = vmul.f32 %v201, %v427
      %v498 = vmul.f32 %v201, %v434
      %v499 = vmul.f32 %v202, %v217
      %v500 = vmul.f32 %v202, %v224
      %v501 = vmul.f32 %v202, %v231
      %v502 = vmul.f32 %v202, %v238
      %v503 = vmul.f32 %v202, %v245
      %v504 = vmul.f32 %v202, %v252
      %v505 = vmul.f32 %v202, %v259
      %v506 = vmul.f32 %v202, %v266
      %v507 = vmul.f32 %v202, %v273
      %v508 = vmul.f32 %v202, %v280
      %v509 = vmul.f32 %v202, %v287
      %v510 = vmul.f32 %v202, %v294
      %v511 = vmul.f32 %v202, %v301
      %v512 = vmul.f32 %v202, %v308
      %v513 = vmul.f32 %v202, %v315
      %v514 = vmul.f32 %v202, %v322
      %v515 = vmul.f32 %v202, %v329
      %v516 = vmul.f32 %v202, %v336
      %v517 = vmul.f32 %v202, %v343
      %v518 = vmul.f32 %v202, %v350
      %v519 = vmul.f32 %v202, %v357
      %v520 = vmul.f32 %v202, %v364
      %v521 = vmul.f32 %v202, %v371
      %v522 = vmul.f32 %v202, %v378
      %v523 = vmul.f32 %v202, %v385
      %v524 = vmul.f32 %v202, %v392
      %v525 = vmul.f32 %v202, %v399
      %v526 = vmul.f32 %v202, %v406
      %v527 = vmul.f32 %v202, %v413
      %v528 = vmul.f32 %v202, %v420
      %v529 = vmul.f32 %v202, %v427
      %v530 = vmul.f32 %v202, %v434
      %595 = vset.pattern.permute.xlu0 0
      %596 = vperm.xlu0 %595, %v467
      %v597 = vpop.permute.xlu0 %596
      %598 = vset.pattern.permute.xlu0 0
      %599 = vperm.xlu0 %598, %v468
      %v600 = vpop.permute.xlu0 %599
      %601 = vset.pattern.permute.xlu0 0
      %602 = vperm.xlu0 %601, %v469
      %v603 = vpop.permute.xlu0 %602
      %604 = vset.pattern.permute.xlu0 0
      %605 = vperm.xlu0 %604, %v470
      %v606 = vpop.permute.xlu0 %605
      %607 = vset.pattern.permute.xlu0 0
      %608 = vperm.xlu0 %607, %v471
      %v609 = vpop.permute.xlu0 %608
      %610 = vset.pattern.permute.xlu0 0
      %611 = vperm.xlu0 %610, %v472
      %v612 = vpop.permute.xlu0 %611
      %613 = vset.pattern.permute.xlu0 0
      %614 = vperm.xlu0 %613, %v473
      %v615 = vpop.permute.xlu0 %614
      %616 = vset.pattern.permute.xlu0 0
      %617 = vperm.xlu0 %616, %v474
      %v618 = vpop.permute.xlu0 %617
      %619 = vset.pattern.permute.xlu0 0
      %620 = vperm.xlu0 %619, %v475
      %v621 = vpop.permute.xlu0 %620
      %622 = vset.pattern.permute.xlu0 0
      %623 = vperm.xlu0 %622, %v476
      %v624 = vpop.permute.xlu0 %623
      %625 = vset.pattern.permute.xlu0 0
      %626 = vperm.xlu0 %625, %v477
      %v627 = vpop.permute.xlu0 %626
      %628 = vset.pattern.permute.xlu0 0
      %629 = vperm.xlu0 %628, %v478
      %v630 = vpop.permute.xlu0 %629
      %631 = vset.pattern.permute.xlu0 0
      %632 = vperm.xlu0 %631, %v479
      %v633 = vpop.permute.xlu0 %632
      %634 = vset.pattern.permute.xlu0 0
      %635 = vperm.xlu0 %634, %v480
      %v636 = vpop.permute.xlu0 %635
      %637 = vset.pattern.permute.xlu0 0
      %638 = vperm.xlu0 %637, %v481
      %v639 = vpop.permute.xlu0 %638
      %640 = vset.pattern.permute.xlu0 0
      %641 = vperm.xlu0 %640, %v482
      %v642 = vpop.permute.xlu0 %641
      %643 = vset.pattern.permute.xlu0 0
      %644 = vperm.xlu0 %643, %v483
      %v645 = vpop.permute.xlu0 %644
      %646 = vset.pattern.permute.xlu0 0
      %647 = vperm.xlu0 %646, %v484
      %v648 = vpop.permute.xlu0 %647
      %649 = vset.pattern.permute.xlu0 0
      %650 = vperm.xlu0 %649, %v485
      %v651 = vpop.permute.xlu0 %650
      %652 = vset.pattern.permute.xlu0 0
      %653 = vperm.xlu0 %652, %v486
      %v654 = vpop.permute.xlu0 %653
      %655 = vset.pattern.permute.xlu0 0
      %656 = vperm.xlu0 %655, %v487
      %v657 = vpop.permute.xlu0 %656
      %658 = vset.pattern.permute.xlu0 0
      %659 = vperm.xlu0 %658, %v488
      %v660 = vpop.permute.xlu0 %659
      %661 = vset.pattern.permute.xlu0 0
      %662 = vperm.xlu0 %661, %v489
      %v663 = vpop.permute.xlu0 %662
      %664 = vset.pattern.permute.xlu0 0
      %665 = vperm.xlu0 %664, %v490
      %v666 = vpop.permute.xlu0 %665
      %667 = vset.pattern.permute.xlu0 0
      %668 = vperm.xlu0 %667, %v491
      %v669 = vpop.permute.xlu0 %668
      %670 = vset.pattern.permute.xlu0 0
      %671 = vperm.xlu0 %670, %v492
      %v672 = vpop.permute.xlu0 %671
      %673 = vset.pattern.permute.xlu0 0
      %674 = vperm.xlu0 %673, %v493
      %v675 = vpop.permute.xlu0 %674
      %676 = vset.pattern.permute.xlu0 0
      %677 = vperm.xlu0 %676, %v494
      %v678 = vpop.permute.xlu0 %677
      %679 = vset.pattern.permute.xlu0 0
      %680 = vperm.xlu0 %679, %v495
      %v681 = vpop.permute.xlu0 %680
      %682 = vset.pattern.permute.xlu0 0
      %683 = vperm.xlu0 %682, %v496
      %v684 = vpop.permute.xlu0 %683
      %685 = vset.pattern.permute.xlu0 0
      %686 = vperm.xlu0 %685, %v497
      %v687 = vpop.permute.xlu0 %686
      %688 = vset.pattern.permute.xlu0 0
      %689 = vperm.xlu0 %688, %v498
      %v690 = vpop.permute.xlu0 %689
      %691 = vset.pattern.permute.xlu0 0
      %692 = vperm.xlu0 %691, %v499
      %v693 = vpop.permute.xlu0 %692
      %694 = vset.pattern.permute.xlu0 0
      %695 = vperm.xlu0 %694, %v500
      %v696 = vpop.permute.xlu0 %695
      %697 = vset.pattern.permute.xlu0 0
      %698 = vperm.xlu0 %697, %v501
      %v699 = vpop.permute.xlu0 %698
      %700 = vset.pattern.permute.xlu0 0
      %701 = vperm.xlu0 %700, %v502
      %v702 = vpop.permute.xlu0 %701
      %703 = vset.pattern.permute.xlu0 0
      %704 = vperm.xlu0 %703, %v503
      %v705 = vpop.permute.xlu0 %704
      %706 = vset.pattern.permute.xlu0 0
      %707 = vperm.xlu0 %706, %v504
      %v708 = vpop.permute.xlu0 %707
      %709 = vset.pattern.permute.xlu0 0
      %710 = vperm.xlu0 %709, %v505
      %v711 = vpop.permute.xlu0 %710
      %712 = vset.pattern.permute.xlu0 0
      %713 = vperm.xlu0 %712, %v506
      %v714 = vpop.permute.xlu0 %713
      %715 = vset.pattern.permute.xlu0 0
      %716 = vperm.xlu0 %715, %v507
      %v717 = vpop.permute.xlu0 %716
      %718 = vset.pattern.permute.xlu0 0
      %719 = vperm.xlu0 %718, %v508
      %v720 = vpop.permute.xlu0 %719
      %721 = vset.pattern.permute.xlu0 0
      %722 = vperm.xlu0 %721, %v509
      %v723 = vpop.permute.xlu0 %722
      %724 = vset.pattern.permute.xlu0 0
      %725 = vperm.xlu0 %724, %v510
      %v726 = vpop.permute.xlu0 %725
      %727 = vset.pattern.permute.xlu0 0
      %728 = vperm.xlu0 %727, %v511
      %v729 = vpop.permute.xlu0 %728
      %730 = vset.pattern.permute.xlu0 0
      %731 = vperm.xlu0 %730, %v512
      %v732 = vpop.permute.xlu0 %731
      %733 = vset.pattern.permute.xlu0 0
      %734 = vperm.xlu0 %733, %v513
      %v735 = vpop.permute.xlu0 %734
      %736 = vset.pattern.permute.xlu0 0
      %737 = vperm.xlu0 %736, %v514
      %v738 = vpop.permute.xlu0 %737
      %739 = vset.pattern.permute.xlu0 0
      %740 = vperm.xlu0 %739, %v515
      %v741 = vpop.permute.xlu0 %740
      %742 = vset.pattern.permute.xlu0 0
      %743 = vperm.xlu0 %742, %v516
      %v744 = vpop.permute.xlu0 %743
      %745 = vset.pattern.permute.xlu0 0
      %746 = vperm.xlu0 %745, %v517
      %v747 = vpop.permute.xlu0 %746
      %748 = vset.pattern.permute.xlu0 0
      %749 = vperm.xlu0 %748, %v518
      %v750 = vpop.permute.xlu0 %749
      %751 = vset.pattern.permute.xlu0 0
      %752 = vperm.xlu0 %751, %v519
      %v753 = vpop.permute.xlu0 %752
      %754 = vset.pattern.permute.xlu0 0
      %755 = vperm.xlu0 %754, %v520
      %v756 = vpop.permute.xlu0 %755
      %757 = vset.pattern.permute.xlu0 0
      %758 = vperm.xlu0 %757, %v521
      %v759 = vpop.permute.xlu0 %758
      %760 = vset.pattern.permute.xlu0 0
      %761 = vperm.xlu0 %760, %v522
      %v762 = vpop.permute.xlu0 %761
      %763 = vset.pattern.permute.xlu0 0
      %764 = vperm.xlu0 %763, %v523
      %v765 = vpop.permute.xlu0 %764
      %766 = vset.pattern.permute.xlu0 0
      %767 = vperm.xlu0 %766, %v524
      %v768 = vpop.permute.xlu0 %767
      %769 = vset.pattern.permute.xlu0 0
      %770 = vperm.xlu0 %769, %v525
      %v771 = vpop.permute.xlu0 %770
      %772 = vset.pattern.permute.xlu0 0
      %773 = vperm.xlu0 %772, %v526
      %v774 = vpop.permute.xlu0 %773
      %775 = vset.pattern.permute.xlu0 0
      %776 = vperm.xlu0 %775, %v527
      %v777 = vpop.permute.xlu0 %776
      %778 = vset.pattern.permute.xlu0 0
      %779 = vperm.xlu0 %778, %v528
      %v780 = vpop.permute.xlu0 %779
      %781 = vset.pattern.permute.xlu0 0
      %782 = vperm.xlu0 %781, %v529
      %v783 = vpop.permute.xlu0 %782
      %784 = vset.pattern.permute.xlu0 0
      %785 = vperm.xlu0 %784, %v530
      %v786 = vpop.permute.xlu0 %785
      %v787 = vlaneseq
      %v788 = vshrl.u32 %v787, 7
      %v789 = vsub.s32 %v91, %v788
      %v790 = vrot.slane %v597, %v789
      %v791 = vlaneseq
      %v792 = vshrl.u32 %v791, 7
      %v793 = vsub.s32 %v91, %v792
      %v794 = vrot.slane %v600, %v793
      %v795 = vlaneseq
      %v796 = vshrl.u32 %v795, 7
      %v797 = vsub.s32 %v91, %v796
      %v798 = vrot.slane %v603, %v797
      %v799 = vlaneseq
      %v800 = vshrl.u32 %v799, 7
      %v801 = vsub.s32 %v91, %v800
      %v802 = vrot.slane %v606, %v801
      %v803 = vlaneseq
      %v804 = vshrl.u32 %v803, 7
      %v805 = vsub.s32 %v91, %v804
      %v806 = vrot.slane %v609, %v805
      %v807 = vlaneseq
      %v808 = vshrl.u32 %v807, 7
      %v809 = vsub.s32 %v91, %v808
      %v810 = vrot.slane %v612, %v809
      %v811 = vlaneseq
      %v812 = vshrl.u32 %v811, 7
      %v813 = vsub.s32 %v91, %v812
      %v814 = vrot.slane %v615, %v813
      %v815 = vlaneseq
      %v816 = vshrl.u32 %v815, 7
      %v817 = vsub.s32 %v91, %v816
      %v818 = vrot.slane %v618, %v817
      %v819 = vlaneseq
      %v820 = vshrl.u32 %v819, 7
      %v821 = vsub.s32 %v91, %v820
      %v822 = vrot.slane %v621, %v821
      %v823 = vlaneseq
      %v824 = vshrl.u32 %v823, 7
      %v825 = vsub.s32 %v91, %v824
      %v826 = vrot.slane %v624, %v825
      %v827 = vlaneseq
      %v828 = vshrl.u32 %v827, 7
      %v829 = vsub.s32 %v91, %v828
      %v830 = vrot.slane %v627, %v829
      %v831 = vlaneseq
      %v832 = vshrl.u32 %v831, 7
      %v833 = vsub.s32 %v91, %v832
      %v834 = vrot.slane %v630, %v833
      %v835 = vlaneseq
      %v836 = vshrl.u32 %v835, 7
      %v837 = vsub.s32 %v91, %v836
      %v838 = vrot.slane %v633, %v837
      %v839 = vlaneseq
      %v840 = vshrl.u32 %v839, 7
      %v841 = vsub.s32 %v91, %v840
      %v842 = vrot.slane %v636, %v841
      %v843 = vlaneseq
      %v844 = vshrl.u32 %v843, 7
      %v845 = vsub.s32 %v91, %v844
      %v846 = vrot.slane %v639, %v845
      %v847 = vlaneseq
      %v848 = vshrl.u32 %v847, 7
      %v849 = vsub.s32 %v91, %v848
      %v850 = vrot.slane %v642, %v849
      %v851 = vlaneseq
      %v852 = vshrl.u32 %v851, 7
      %v853 = vsub.s32 %v91, %v852
      %v854 = vrot.slane %v645, %v853
      %v855 = vlaneseq
      %v856 = vshrl.u32 %v855, 7
      %v857 = vsub.s32 %v91, %v856
      %v858 = vrot.slane %v648, %v857
      %v859 = vlaneseq
      %v860 = vshrl.u32 %v859, 7
      %v861 = vsub.s32 %v91, %v860
      %v862 = vrot.slane %v651, %v861
      %v863 = vlaneseq
      %v864 = vshrl.u32 %v863, 7
      %v865 = vsub.s32 %v91, %v864
      %v866 = vrot.slane %v654, %v865
      %v867 = vlaneseq
      %v868 = vshrl.u32 %v867, 7
      %v869 = vsub.s32 %v91, %v868
      %v870 = vrot.slane %v657, %v869
      %v871 = vlaneseq
      %v872 = vshrl.u32 %v871, 7
      %v873 = vsub.s32 %v91, %v872
      %v874 = vrot.slane %v660, %v873
      %v875 = vlaneseq
      %v876 = vshrl.u32 %v875, 7
      %v877 = vsub.s32 %v91, %v876
      %v878 = vrot.slane %v663, %v877
      %v879 = vlaneseq
      %v880 = vshrl.u32 %v879, 7
      %v881 = vsub.s32 %v91, %v880
      %v882 = vrot.slane %v666, %v881
      %v883 = vlaneseq
      %v884 = vshrl.u32 %v883, 7
      %v885 = vsub.s32 %v91, %v884
      %v886 = vrot.slane %v669, %v885
      %v887 = vlaneseq
      %v888 = vshrl.u32 %v887, 7
      %v889 = vsub.s32 %v91, %v888
      %v890 = vrot.slane %v672, %v889
      %v891 = vlaneseq
      %v892 = vshrl.u32 %v891, 7
      %v893 = vsub.s32 %v91, %v892
      %v894 = vrot.slane %v675, %v893
      %v895 = vlaneseq
      %v896 = vshrl.u32 %v895, 7
      %v897 = vsub.s32 %v91, %v896
      %v898 = vrot.slane %v678, %v897
      %v899 = vlaneseq
      %v900 = vshrl.u32 %v899, 7
      %v901 = vsub.s32 %v91, %v900
      %v902 = vrot.slane %v681, %v901
      %v903 = vlaneseq
      %v904 = vshrl.u32 %v903, 7
      %v905 = vsub.s32 %v91, %v904
      %v906 = vrot.slane %v684, %v905
      %v907 = vlaneseq
      %v908 = vshrl.u32 %v907, 7
      %v909 = vsub.s32 %v91, %v908
      %v910 = vrot.slane %v687, %v909
      %v911 = vlaneseq
      %v912 = vshrl.u32 %v911, 7
      %v913 = vsub.s32 %v91, %v912
      %v914 = vrot.slane %v690, %v913
      %v915 = vlaneseq
      %v916 = vshrl.u32 %v915, 7
      %v917 = vsub.s32 %v91, %v916
      %v918 = vrot.slane %v693, %v917
      %v919 = vlaneseq
      %v920 = vshrl.u32 %v919, 7
      %v921 = vsub.s32 %v91, %v920
      %v922 = vrot.slane %v696, %v921
      %v923 = vlaneseq
      %v924 = vshrl.u32 %v923, 7
      %v925 = vsub.s32 %v91, %v924
      %v926 = vrot.slane %v699, %v925
      %v927 = vlaneseq
      %v928 = vshrl.u32 %v927, 7
      %v929 = vsub.s32 %v91, %v928
      %v930 = vrot.slane %v702, %v929
      %v931 = vlaneseq
      %v932 = vshrl.u32 %v931, 7
      %v933 = vsub.s32 %v91, %v932
      %v934 = vrot.slane %v705, %v933
      %v935 = vlaneseq
      %v936 = vshrl.u32 %v935, 7
      %v937 = vsub.s32 %v91, %v936
      %v938 = vrot.slane %v708, %v937
      %v939 = vlaneseq
      %v940 = vshrl.u32 %v939, 7
      %v941 = vsub.s32 %v91, %v940
      %v942 = vrot.slane %v711, %v941
      %v943 = vlaneseq
      %v944 = vshrl.u32 %v943, 7
      %v945 = vsub.s32 %v91, %v944
      %v946 = vrot.slane %v714, %v945
      %v947 = vlaneseq
      %v948 = vshrl.u32 %v947, 7
      %v949 = vsub.s32 %v91, %v948
      %v950 = vrot.slane %v717, %v949
      %v951 = vlaneseq
      %v952 = vshrl.u32 %v951, 7
      %v953 = vsub.s32 %v91, %v952
      %v954 = vrot.slane %v720, %v953
      %v955 = vlaneseq
      %v956 = vshrl.u32 %v955, 7
      %v957 = vsub.s32 %v91, %v956
      %v958 = vrot.slane %v723, %v957
      %v959 = vlaneseq
      %v960 = vshrl.u32 %v959, 7
      %v961 = vsub.s32 %v91, %v960
      %v962 = vrot.slane %v726, %v961
      %v963 = vlaneseq
      %v964 = vshrl.u32 %v963, 7
      %v965 = vsub.s32 %v91, %v964
      %v966 = vrot.slane %v729, %v965
      %v967 = vlaneseq
      %v968 = vshrl.u32 %v967, 7
      %v969 = vsub.s32 %v91, %v968
      %v970 = vrot.slane %v732, %v969
      %v971 = vlaneseq
      %v972 = vshrl.u32 %v971, 7
      %v973 = vsub.s32 %v91, %v972
      %v974 = vrot.slane %v735, %v973
      %v975 = vlaneseq
      %v976 = vshrl.u32 %v975, 7
      %v977 = vsub.s32 %v91, %v976
      %v978 = vrot.slane %v738, %v977
      %v979 = vlaneseq
      %v980 = vshrl.u32 %v979, 7
      %v981 = vsub.s32 %v91, %v980
      %v982 = vrot.slane %v741, %v981
      %v983 = vlaneseq
      %v984 = vshrl.u32 %v983, 7
      %v985 = vsub.s32 %v91, %v984
      %v986 = vrot.slane %v744, %v985
      %v987 = vlaneseq
      %v988 = vshrl.u32 %v987, 7
      %v989 = vsub.s32 %v91, %v988
      %v990 = vrot.slane %v747, %v989
      %v991 = vlaneseq
      %v992 = vshrl.u32 %v991, 7
      %v993 = vsub.s32 %v91, %v992
      %v994 = vrot.slane %v750, %v993
      %v995 = vlaneseq
      %v996 = vshrl.u32 %v995, 7
      %v997 = vsub.s32 %v91, %v996
      %v998 = vrot.slane %v753, %v997
      %v999 = vlaneseq
      %v1000 = vshrl.u32 %v999, 7
      %v1001 = vsub.s32 %v91, %v1000
      %v1002 = vrot.slane %v756, %v1001
      %v1003 = vlaneseq
      %v1004 = vshrl.u32 %v1003, 7
      %v1005 = vsub.s32 %v91, %v1004
      %v1006 = vrot.slane %v759, %v1005
      %v1007 = vlaneseq
      %v1008 = vshrl.u32 %v1007, 7
      %v1009 = vsub.s32 %v91, %v1008
      %v1010 = vrot.slane %v762, %v1009
      %v1011 = vlaneseq
      %v1012 = vshrl.u32 %v1011, 7
      %v1013 = vsub.s32 %v91, %v1012
      %v1014 = vrot.slane %v765, %v1013
      %v1015 = vlaneseq
      %v1016 = vshrl.u32 %v1015, 7
      %v1017 = vsub.s32 %v91, %v1016
      %v1018 = vrot.slane %v768, %v1017
      %v1019 = vlaneseq
      %v1020 = vshrl.u32 %v1019, 7
      %v1021 = vsub.s32 %v91, %v1020
      %v1022 = vrot.slane %v771, %v1021
      %v1023 = vlaneseq
      %v1024 = vshrl.u32 %v1023, 7
      %v1025 = vsub.s32 %v91, %v1024
      %v1026 = vrot.slane %v774, %v1025
      %v1027 = vlaneseq
      %v1028 = vshrl.u32 %v1027, 7
      %v1029 = vsub.s32 %v91, %v1028
      %v1030 = vrot.slane %v777, %v1029
      %v1031 = vlaneseq
      %v1032 = vshrl.u32 %v1031, 7
      %v1033 = vsub.s32 %v91, %v1032
      %v1034 = vrot.slane %v780, %v1033
      %v1035 = vlaneseq
      %v1036 = vshrl.u32 %v1035, 7
      %v1037 = vsub.s32 %v91, %v1036
      %v1038 = vrot.slane %v783, %v1037
      %v1039 = vlaneseq
      %v1040 = vshrl.u32 %v1039, 7
      %v1041 = vsub.s32 %v91, %v1040
      %v1042 = vrot.slane %v786, %v1041
      %v1043 = vsel %vm136, %v794, %v790
      %vm1044 = vcmask 1042434
      %v1045 = vsel %vm1044, %v798, %v1043
      %vm1046 = vcmask 1043459
      %v1047 = vsel %vm1046, %v802, %v1045
      %vm1048 = vcmask 1044484
      %v1049 = vsel %vm1048, %v806, %v1047
      %vm1050 = vcmask 1045509
      %v1051 = vsel %vm1050, %v810, %v1049
      %vm1052 = vcmask 1046534
      %v1053 = vsel %vm1052, %v814, %v1051
      %vm1054 = vcmask 1047559
      %v1055 = vsel %vm1054, %v818, %v1053
      %v1056 = vsel %vm136, %v826, %v822
      %v1057 = vsel %vm1044, %v830, %v1056
      %v1058 = vsel %vm1046, %v834, %v1057
      %v1059 = vsel %vm1048, %v838, %v1058
      %v1060 = vsel %vm1050, %v842, %v1059
      %v1061 = vsel %vm1052, %v846, %v1060
      %v1062 = vsel %vm1054, %v850, %v1061
      %v1063 = vsel %vm136, %v858, %v854
      %v1064 = vsel %vm1044, %v862, %v1063
      %v1065 = vsel %vm1046, %v866, %v1064
      %v1066 = vsel %vm1048, %v870, %v1065
      %v1067 = vsel %vm1050, %v874, %v1066
      %v1068 = vsel %vm1052, %v878, %v1067
      %v1069 = vsel %vm1054, %v882, %v1068
      %v1070 = vsel %vm136, %v890, %v886
      %v1071 = vsel %vm1044, %v894, %v1070
      %v1072 = vsel %vm1046, %v898, %v1071
      %v1073 = vsel %vm1048, %v902, %v1072
      %v1074 = vsel %vm1050, %v906, %v1073
      %v1075 = vsel %vm1052, %v910, %v1074
      %v1076 = vsel %vm1054, %v914, %v1075
      %v1077 = vsel %vm136, %v922, %v918
      %v1078 = vsel %vm1044, %v926, %v1077
      %v1079 = vsel %vm1046, %v930, %v1078
      %v1080 = vsel %vm1048, %v934, %v1079
      %v1081 = vsel %vm1050, %v938, %v1080
      %v1082 = vsel %vm1052, %v942, %v1081
      %v1083 = vsel %vm1054, %v946, %v1082
      %v1084 = vsel %vm136, %v954, %v950
      %v1085 = vsel %vm1044, %v958, %v1084
      %v1086 = vsel %vm1046, %v962, %v1085
      %v1087 = vsel %vm1048, %v966, %v1086
      %v1088 = vsel %vm1050, %v970, %v1087
      %v1089 = vsel %vm1052, %v974, %v1088
      %v1090 = vsel %vm1054, %v978, %v1089
      %v1091 = vsel %vm136, %v986, %v982
      %v1092 = vsel %vm1044, %v990, %v1091
      %v1093 = vsel %vm1046, %v994, %v1092
      %v1094 = vsel %vm1048, %v998, %v1093
      %v1095 = vsel %vm1050, %v1002, %v1094
      %v1096 = vsel %vm1052, %v1006, %v1095
      %v1097 = vsel %vm1054, %v1010, %v1096
      %v1098 = vsel %vm136, %v1018, %v1014
      %v1099 = vsel %vm1044, %v1022, %v1098
      %v1100 = vsel %vm1046, %v1026, %v1099
      %v1101 = vsel %vm1048, %v1030, %v1100
      %v1102 = vsel %vm1050, %v1034, %v1101
      %v1103 = vsel %vm1052, %v1038, %v1102
      %v1104 = vsel %vm1054, %v1042, %v1103
      %vm1113 = vcmask 15360
      %v1114 = vsel %vm1113, %v1055, 0.0
      %1115 = vadd.xlane.f32.xlu0 %v1114
      %v1116 = vpop.xlane.xlu0 %1115
      %v1117 = vsel %vm1113, %v1062, 0.0
      %1118 = vadd.xlane.f32.xlu0 %v1117
      %v1119 = vpop.xlane.xlu0 %1118
      %v1120 = vsel %vm1113, %v1069, 0.0
      %1121 = vadd.xlane.f32.xlu0 %v1120
      %v1122 = vpop.xlane.xlu0 %1121
      %v1123 = vsel %vm1113, %v1076, 0.0
      %1124 = vadd.xlane.f32.xlu0 %v1123
      %v1125 = vpop.xlane.xlu0 %1124
      %v1126 = vsel %vm1113, %v1083, 0.0
      %1127 = vadd.xlane.f32.xlu0 %v1126
      %v1128 = vpop.xlane.xlu0 %1127
      %v1129 = vsel %vm1113, %v1090, 0.0
      %1130 = vadd.xlane.f32.xlu0 %v1129
      %v1131 = vpop.xlane.xlu0 %1130
      %v1132 = vsel %vm1113, %v1097, 0.0
      %1133 = vadd.xlane.f32.xlu0 %v1132
      %v1134 = vpop.xlane.xlu0 %1133
      %v1135 = vsel %vm1113, %v1104, 0.0
      %1136 = vadd.xlane.f32.xlu0 %v1135
      %v1137 = vpop.xlane.xlu0 %1136
      %v1138 = vld [vmem:[%s4] sm:$0x1]
      %v1140 = vlaneseq
      %v1141 = vshrl.u32 %v1140, 7
      %v1142 = vsub.s32 0, %v1141
      %v1143 = vrot.slane %v1138, %v1142
      %1145 = vbcast.lane.b32.xlu0 %v1143, 256
      %v1146 = vpop.permute.xlu0 %1145
      %s1148 = sor.u32 256, 8
      %1149 = vbcast.lane.b32.xlu0 %v1143, %s1148
      %v1150 = vpop.permute.xlu0 %1149
      %s1152 = sor.u32 256, 16
      %1153 = vbcast.lane.b32.xlu0 %v1143, %s1152
      %v1154 = vpop.permute.xlu0 %1153
      %s1156 = sor.u32 256, 24
      %1157 = vbcast.lane.b32.xlu0 %v1143, %s1156
      %v1158 = vpop.permute.xlu0 %1157
      %v1163 = vadd.f32 %v1116, %v1146
      %v1164 = vadd.f32 %v1119, %v1150
      %v1165 = vadd.f32 %v1122, %v1154
      %v1166 = vadd.f32 %v1125, %v1158
      %v1167 = vadd.f32 %v1128, %v1146
      %v1168 = vadd.f32 %v1131, %v1150
      %v1169 = vadd.f32 %v1134, %v1154
      %v1170 = vadd.f32 %v1137, %v1158
      %v1171 = vxor.u32 %v1163, 2147483648
      %v1172 = vxor.u32 %v1164, 2147483648
      %v1173 = vxor.u32 %v1165, 2147483648
      %v1174 = vxor.u32 %v1166, 2147483648
      %v1175 = vxor.u32 %v1167, 2147483648
      %v1176 = vxor.u32 %v1168, 2147483648
      %v1177 = vxor.u32 %v1169, 2147483648
      %v1178 = vxor.u32 %v1170, 2147483648
      %v1179 = vmul.f32 %v1171, 1.442695
      %v1180 = vpow.pop %v1179
      %v1181 = vmul.f32 %v1172, 1.442695
      %v1182 = vpow.pop %v1181
      %v1183 = vmul.f32 %v1173, 1.442695
      %v1184 = vpow.pop %v1183
      %v1185 = vmul.f32 %v1174, 1.442695
      %v1186 = vpow.pop %v1185
      %v1187 = vmul.f32 %v1175, 1.442695
      %v1188 = vpow.pop %v1187
      %v1189 = vmul.f32 %v1176, 1.442695
      %v1190 = vpow.pop %v1189
      %v1191 = vmul.f32 %v1177, 1.442695
      %v1192 = vpow.pop %v1191
      %v1193 = vmul.f32 %v1178, 1.442695
      %v1194 = vpow.pop %v1193
      %v1195 = vadd.f32 %v1180, 1.0
      %v1196 = vadd.f32 %v1182, 1.0
      %v1197 = vadd.f32 %v1184, 1.0
      %v1198 = vadd.f32 %v1186, 1.0
      %v1199 = vadd.f32 %v1188, 1.0
      %v1200 = vadd.f32 %v1190, 1.0
      %v1201 = vadd.f32 %v1192, 1.0
      %v1202 = vadd.f32 %v1194, 1.0
      %v1203 = vrcp.pop %v1195
      %v1204 = vmul.f32 1.0, %v1203
      %v1205 = vrcp.pop %v1196
      %v1206 = vmul.f32 1.0, %v1205
      %v1207 = vrcp.pop %v1197
      %v1208 = vmul.f32 1.0, %v1207
      %v1209 = vrcp.pop %v1198
      %v1210 = vmul.f32 1.0, %v1209
      %v1211 = vrcp.pop %v1199
      %v1212 = vmul.f32 1.0, %v1211
      %v1213 = vrcp.pop %v1200
      %v1214 = vmul.f32 1.0, %v1213
      %v1215 = vrcp.pop %v1201
      %v1216 = vmul.f32 1.0, %v1215
      %v1217 = vrcp.pop %v1202
      %v1218 = vmul.f32 1.0, %v1217
      %1227 = vset.pattern.permute.xlu0 0
      %1228 = vperm.xlu0 %1227, %v1204
      %v1229 = vpop.permute.xlu0 %1228
      %1230 = vset.pattern.permute.xlu0 0
      %1231 = vperm.xlu0 %1230, %v1206
      %v1232 = vpop.permute.xlu0 %1231
      %1233 = vset.pattern.permute.xlu0 0
      %1234 = vperm.xlu0 %1233, %v1208
      %v1235 = vpop.permute.xlu0 %1234
      %1236 = vset.pattern.permute.xlu0 0
      %1237 = vperm.xlu0 %1236, %v1210
      %v1238 = vpop.permute.xlu0 %1237
      %1239 = vset.pattern.permute.xlu0 0
      %1240 = vperm.xlu0 %1239, %v1212
      %v1241 = vpop.permute.xlu0 %1240
      %1242 = vset.pattern.permute.xlu0 0
      %1243 = vperm.xlu0 %1242, %v1214
      %v1244 = vpop.permute.xlu0 %1243
      %1245 = vset.pattern.permute.xlu0 0
      %1246 = vperm.xlu0 %1245, %v1216
      %v1247 = vpop.permute.xlu0 %1246
      %1248 = vset.pattern.permute.xlu0 0
      %1249 = vperm.xlu0 %1248, %v1218
      %v1250 = vpop.permute.xlu0 %1249
      %v1251 = vlaneseq
      %v1252 = vshrl.u32 %v1251, 7
      %v1253 = vsub.s32 %v91, %v1252
      %v1254 = vrot.slane %v1229, %v1253
      %v1255 = vlaneseq
      %v1256 = vshrl.u32 %v1255, 7
      %v1257 = vsub.s32 %v96, %v1256
      %v1258 = vrot.slane %v1232, %v1257
      %v1259 = vsel %vm101, %v1258, %v1254
      %v1260 = vlaneseq
      %v1261 = vshrl.u32 %v1260, 7
      %v1262 = vsub.s32 %v103, %v1261
      %v1263 = vrot.slane %v1235, %v1262
      %v1264 = vsel %vm108, %v1263, %v1259
      %v1265 = vlaneseq
      %v1266 = vshrl.u32 %v1265, 7
      %v1267 = vsub.s32 %v110, %v1266
      %v1268 = vrot.slane %v1238, %v1267
      %v1269 = vsel %vm115, %v1268, %v1264
      %v1270 = vlaneseq
      %v1271 = vshrl.u32 %v1270, 7
      %v1272 = vsub.s32 %v91, %v1271
      %v1273 = vrot.slane %v1241, %v1272
      %v1274 = vlaneseq
      %v1275 = vshrl.u32 %v1274, 7
      %v1276 = vsub.s32 %v96, %v1275
      %v1277 = vrot.slane %v1244, %v1276
      %v1278 = vsel %vm101, %v1277, %v1273
      %v1279 = vlaneseq
      %v1280 = vshrl.u32 %v1279, 7
      %v1281 = vsub.s32 %v103, %v1280
      %v1282 = vrot.slane %v1247, %v1281
      %v1283 = vsel %vm108, %v1282, %v1278
      %v1284 = vlaneseq
      %v1285 = vshrl.u32 %v1284, 7
      %v1286 = vsub.s32 %v110, %v1285
      %v1287 = vrot.slane %v1250, %v1286
      %v1288 = vsel %vm115, %v1287, %v1283
      %vm1291 = vcmask 253952
      %1292 = vst.msk [vmem:[#allocation6] sm:$0x1] %vm1291, %v1269
      %1293 = vst.msk [vmem:[#allocation6 + $0x1] sm:$0x1] %vm1291, %v1288
    $region33: #{tpu_custom_call.1} parent=1 // pred_fallthru
      _
    // Predicated region
    $region34: #{tpu_custom_call.1} parent=1 // pred_check
      _
    $region35: #{tpu_custom_call.1} parent=1 // pred_check_branch
      %1295 = sbr.rel (0) target = $region37
    $region36: #{tpu_custom_call.1} parent=1 // pred_region
      %s1297 = ssub.s32 32, 32
      %1298 = vsyncadd [#allocation5], %s1297
      %s1299 = sshll.u32 [#allocation6], 4
      %s1300 = int_to_ptr.vmem [resolvable:$true] %s1299
      %1305 = dma.vmem_to_hbm [thread:$0]  %s1300, 32, %s5, [#allocation5], 16, 16, 1
    $region37: #{tpu_custom_call.1} parent=1 // pred_fallthru
      _
    // Predicated region
    $region38: #{tpu_custom_call.1} parent=1 // pred_check
      _
    $region39: #{tpu_custom_call.1} parent=1 // pred_check_branch
      %1307 = sbr.rel (0) target = $region41
    $region40: #{tpu_custom_call.1} parent=1 // pred_region
      %1308 = dma.done [#allocation5], 32
    $region41: #{tpu_custom_call.1} parent=1 // pred_fallthru
      _
    %1309 = vsyncpa [#allocation4], 1
    %1310 = vsyncpa [#allocation5], 1

</llo_original>
